<compile_context>
chip_gen: v7x
topology: tpu7x:2x2x1
jax: 0.10.0
libtpu: 0.0.40
codegen_flags: <defaults>
</compile_context>

<pallas_src>
import functools

import jax
import jax.numpy as jnp
from jax.experimental import pallas as pl
from jax.experimental.pallas import tpu as pltpu  # noqa: F401  (TPU backend)


# --------------------------------------------------------------------------
# Fused kernel factory (order / layers are static, closed over).
# --------------------------------------------------------------------------
def _make_fused_kernel(order, layers):
    n = order

    def kernel(x_ref, yobs_ref, p_ref, wt_ref, out_ref):
        Bsz, T = x_ref.shape

        x = x_ref[...]                       # (B, T)
        yo = yobs_ref[...]                   # (B, T)
        # Replicate inputs across the layer dim ONCE (rows = layer*B + b) so
        # every layer's recurrence runs in the same vector ops.
        if layers > 1:
            x_rep = jnp.concatenate([x] * layers, axis=0)    # (layers*B, T)
            yo_rep = jnp.concatenate([yo] * layers, axis=0)  # (layers*B, T)
        else:
            x_rep, yo_rep = x, yo

        slab = p_ref[...]                    # (layers*B, n*n + 3n)
        # Hoisted once (no per-iteration transposes / broadcasts):
        #   AT_cols[j][r, i] = A_layer(r)[i, j]
        AT_cols = [slab[:, j * n:(j + 1) * n] for j in range(n)]
        Bv = slab[:, n * n:n * n + n]                  # (R, n)
        Cv = slab[:, n * n + n:n * n + 2 * n]          # (R, n)
        Lv = slab[:, n * n + 2 * n:n * n + 3 * n]      # (R, n)

        # Observer state kept in vregs (loop-carried value, ~layers*B*n floats).
        h = jnp.zeros_like(Bv)                          # (R, n)

        cols = []                                       # y_hat_t per step, (R, 1)
        for t in range(T):                              # static unroll over seq_len
            # y_hat[r] = sum_j h[r, j] * C[r, j]   (pure VPU FMAs)
            y_hat = h[:, 0:1] * Cv[:, 0:1]
            for j in range(1, n):
                y_hat = y_hat + h[:, j:j + 1] * Cv[:, j:j + 1]
            cols.append(y_hat)

            u = x_rep[:, t:t + 1]                       # (R, 1)
            err = yo_rep[:, t:t + 1] - y_hat            # (R, 1)
            # h_{t+1}[r, i] = sum_j h[r, j]*A[i, j] + u*B[i] + err*L[i]
            h_new = u * Bv + err * Lv
            for j in range(n):
                h_new = h_new + h[:, j:j + 1] * AT_cols[j]
            h = h_new

        yh = jnp.concatenate(cols, axis=-1)             # (R, T)  raw y_hat
        # combined = torch.cat([tanh(out_layer0), tanh(out_layer1), ...], dim=1)
        combined = jnp.tanh(jnp.concatenate(
            [yh[l * Bsz:(l + 1) * Bsz, :] for l in range(layers)], axis=-1))
        # Bias-free FC (weight pre-transposed to (T*layers, T)) + final Tanh.
        out_ref[...] = jnp.tanh(
            jnp.dot(combined, wt_ref[...],
                    preferred_element_type=jnp.float32))

    return kernel


# --------------------------------------------------------------------------
# Wrapper-side parameter packing (one-time layout plumbing on constants).
# --------------------------------------------------------------------------
def pack_state_params(layer_params, batch):
    """Pack A/B/C/L for each layer into a single (layers*batch, n*n+3n) slab.

    Row r = layer*batch + b holds [A.T.flatten() | B | C | L] for that layer
    (repeated across batch so the kernel recurrence is plain 2-D broadcasting).
    """
    rows = []
    for p in layer_params:
        A = p["A"]
        n = A.shape[0]
        row = jnp.concatenate([
            A.T.reshape(1, n * n),
            p["B"].reshape(1, n),
            p["C"].reshape(1, n),
            p["L"].reshape(1, n),
        ], axis=1)                                           # (1, n*n+3n)
        rows.append(jnp.broadcast_to(row, (batch, n * n + 3 * n)))
    return jnp.concatenate(rows, axis=0)                     # (layers*batch, ...)


# --------------------------------------------------------------------------
# ParallelModel forward (single fused pallas_call)
# --------------------------------------------------------------------------
def parallel_model_forward(params, x, y_obs, *, seq_len, layers, order):
    assert layers >= 2
    assert y_obs.shape[1] == seq_len
    B = x.shape[0]

    # Reference forward: layer 1 uses state_layer1, every layer >= 2 reuses
    # state_layer2 (matches the PyTorch source as written).
    layer_list = [params["layers"][0]] + [params["layers"][1]] * (layers - 1)
    p_slab = pack_state_params(layer_list, B)        # (layers*B, n*n+3n)
    wt = params["fc_w"].T                            # (seq_len*layers, seq_len)

    def full(shape):
        return pl.BlockSpec(shape, lambda i: (0, 0))

    # NOTE: grid=(1,) is fine at these tiny shapes; for real batch sizes add a
    # leading "parallel" batch-tile grid axis (free ~2x on v7x's 2 TCs).
    return pl.pallas_call(
        _make_fused_kernel(order, layers),
        out_shape=jax.ShapeDtypeStruct((B, seq_len), jnp.float32),
        grid=(1,),
        in_specs=[full((B, seq_len)), full((B, seq_len)),
                  full(p_slab.shape), full(wt.shape)],
        out_specs=full((B, seq_len)),
    )(x, y_obs, p_slab, wt)


# --------------------------------------------------------------------------
# Parameter init (mirrors the PyTorch module's init ranges)
# --------------------------------------------------------------------------
def init_params(key, order, layers, seq_len):
    params = {"layers": []}
    for _ in range(layers):
        key, k1, k2, k3, k4 = jax.random.split(key, 5)
        params["layers"].append({
            "A": jax.random.uniform(k1, (order, order), jnp.float32, -0.5, 0.5),
            "B": jax.random.uniform(k2, (order, 1), jnp.float32, -0.5, 0.5),
            "C": jax.random.uniform(k3, (order, 1), jnp.float32, -0.5, 0.5),
            "L": jax.random.uniform(k4, (order, 1), jnp.float32, -0.5, 0.5),
        })
    key, kw = jax.random.split(key)
    # PyTorch: nn.init.uniform_(w, 0, 0.5) on Linear(seq_len*layers, seq_len, bias=False)
    params["fc_w"] = jax.random.uniform(
        kw, (seq_len, seq_len * layers), jnp.float32, 0.0, 0.5)
    return params


if __name__ == "__main__":
    ORDER, LAYERS, SEQ_LEN, BATCH = 3, 2, 8, 2

    key = jax.random.PRNGKey(0)
    key, kx, ky = jax.random.split(key, 3)
    x = jax.random.normal(kx, (BATCH, SEQ_LEN), jnp.float32)
    y_obs = jax.random.normal(ky, (BATCH, SEQ_LEN), jnp.float32)

    params = init_params(key, ORDER, LAYERS, SEQ_LEN)

    fwd = jax.jit(functools.partial(
        parallel_model_forward, seq_len=SEQ_LEN, layers=LAYERS, order=ORDER))
    out = fwd(params, x, y_obs)
    out = jax.block_until_ready(out)

    assert out.shape == (BATCH, SEQ_LEN)
    assert bool(jnp.all(jnp.isfinite(out)))
    print("KERNEL_OK")
</pallas_src>

<mosaic_0001>
module attributes {stable_mosaic.version = 11 : i64} {
  func.func @kernel(%arg0: i32, %arg1: memref<2x8xf32, #tpu.memory_space<vmem>>, %arg2: memref<2x8xf32, #tpu.memory_space<vmem>>, %arg3: memref<4x18xf32, #tpu.memory_space<vmem>>, %arg4: memref<16x8xf32, #tpu.memory_space<vmem>>, %arg5: memref<2x8xf32, #tpu.memory_space<vmem>>) attributes {dimension_semantics = [#tpu.dimension_semantics<arbitrary>], iteration_bounds = array<i64: 1>, scalar_prefetch = 0 : i64, scratch_operands = 0 : i64, tpu.core_type = #tpu.core_type<tc>, window_params = [{pipeline_mode = #tpu.pipeline_mode<synchronous>, transform_indices = @transform_0, window_bounds = array<i64: 2, 8>}, {pipeline_mode = #tpu.pipeline_mode<synchronous>, transform_indices = @transform_1, window_bounds = array<i64: 2, 8>}, {pipeline_mode = #tpu.pipeline_mode<synchronous>, transform_indices = @transform_2, window_bounds = array<i64: 4, 18>}, {pipeline_mode = #tpu.pipeline_mode<synchronous>, transform_indices = @transform_3, window_bounds = array<i64: 16, 8>}, {pipeline_mode = #tpu.pipeline_mode<synchronous>, transform_indices = @transform_4, window_bounds = array<i64: 2, 8>}]} {
    %c0 = arith.constant 0 : index
    %c0_0 = arith.constant 0 : index
    %0 = vector.load %arg1[%c0, %c0_0] : memref<2x8xf32, #tpu.memory_space<vmem>>, vector<2x8xf32>
    %c0_1 = arith.constant 0 : index
    %c0_2 = arith.constant 0 : index
    %1 = vector.load %arg2[%c0_1, %c0_2] : memref<2x8xf32, #tpu.memory_space<vmem>>, vector<2x8xf32>
    %2 = tpu.concatenate %0, %0 in 0 : vector<2x8xf32>, vector<2x8xf32> -> vector<4x8xf32>
    %3 = tpu.concatenate %1, %1 in 0 : vector<2x8xf32>, vector<2x8xf32> -> vector<4x8xf32>
    %c0_3 = arith.constant 0 : index
    %c0_4 = arith.constant 0 : index
    %4 = vector.load %arg3[%c0_3, %c0_4] : memref<4x18xf32, #tpu.memory_space<vmem>>, vector<4x18xf32>
    %5 = vector.extract_strided_slice %4 {offsets = [0, 0], sizes = [4, 3], strides = [1, 1]} : vector<4x18xf32> to vector<4x3xf32>
    %6 = vector.extract_strided_slice %4 {offsets = [0, 3], sizes = [4, 3], strides = [1, 1]} : vector<4x18xf32> to vector<4x3xf32>
    %7 = vector.extract_strided_slice %4 {offsets = [0, 6], sizes = [4, 3], strides = [1, 1]} : vector<4x18xf32> to vector<4x3xf32>
    %8 = vector.extract_strided_slice %4 {offsets = [0, 9], sizes = [4, 3], strides = [1, 1]} : vector<4x18xf32> to vector<4x3xf32>
    %9 = vector.extract_strided_slice %4 {offsets = [0, 12], sizes = [4, 3], strides = [1, 1]} : vector<4x18xf32> to vector<4x3xf32>
    %10 = vector.extract_strided_slice %4 {offsets = [0, 15], sizes = [4, 3], strides = [1, 1]} : vector<4x18xf32> to vector<4x3xf32>
    %cst = arith.constant 0.000000e+00 : f32
    %11 = vector.broadcast %cst : f32 to vector<4x3xf32>
    %12 = vector.extract_strided_slice %11 {offsets = [0, 0], sizes = [4, 1], strides = [1, 1]} : vector<4x3xf32> to vector<4x1xf32>
    %13 = vector.extract_strided_slice %9 {offsets = [0, 0], sizes = [4, 1], strides = [1, 1]} : vector<4x3xf32> to vector<4x1xf32>
    %14 = arith.mulf %12, %13 : vector<4x1xf32>
    %15 = vector.extract_strided_slice %11 {offsets = [0, 1], sizes = [4, 1], strides = [1, 1]} : vector<4x3xf32> to vector<4x1xf32>
    %16 = vector.extract_strided_slice %9 {offsets = [0, 1], sizes = [4, 1], strides = [1, 1]} : vector<4x3xf32> to vector<4x1xf32>
    %17 = arith.mulf %15, %16 : vector<4x1xf32>
    %18 = arith.addf %14, %17 : vector<4x1xf32>
    %19 = vector.extract_strided_slice %11 {offsets = [0, 2], sizes = [4, 1], strides = [1, 1]} : vector<4x3xf32> to vector<4x1xf32>
    %20 = vector.extract_strided_slice %9 {offsets = [0, 2], sizes = [4, 1], strides = [1, 1]} : vector<4x3xf32> to vector<4x1xf32>
    %21 = arith.mulf %19, %20 : vector<4x1xf32>
    %22 = arith.addf %18, %21 : vector<4x1xf32>
    %23 = vector.extract_strided_slice %2 {offsets = [0, 0], sizes = [4, 1], strides = [1, 1]} : vector<4x8xf32> to vector<4x1xf32>
    %24 = vector.extract_strided_slice %3 {offsets = [0, 0], sizes = [4, 1], strides = [1, 1]} : vector<4x8xf32> to vector<4x1xf32>
    %25 = arith.subf %24, %22 : vector<4x1xf32>
    %26 = vector.broadcast %23 : vector<4x1xf32> to vector<4x3xf32>
    %27 = arith.mulf %26, %8 : vector<4x3xf32>
    %28 = vector.broadcast %25 : vector<4x1xf32> to vector<4x3xf32>
    %29 = arith.mulf %28, %10 : vector<4x3xf32>
    %30 = arith.addf %27, %29 : vector<4x3xf32>
    %31 = vector.extract_strided_slice %11 {offsets = [0, 0], sizes = [4, 1], strides = [1, 1]} : vector<4x3xf32> to vector<4x1xf32>
    %32 = vector.broadcast %31 : vector<4x1xf32> to vector<4x3xf32>
    %33 = arith.mulf %32, %5 : vector<4x3xf32>
    %34 = arith.addf %30, %33 : vector<4x3xf32>
    %35 = vector.extract_strided_slice %11 {offsets = [0, 1], sizes = [4, 1], strides = [1, 1]} : vector<4x3xf32> to vector<4x1xf32>
    %36 = vector.broadcast %35 : vector<4x1xf32> to vector<4x3xf32>
    %37 = arith.mulf %36, %6 : vector<4x3xf32>
    %38 = arith.addf %34, %37 : vector<4x3xf32>
    %39 = vector.extract_strided_slice %11 {offsets = [0, 2], sizes = [4, 1], strides = [1, 1]} : vector<4x3xf32> to vector<4x1xf32>
    %40 = vector.broadcast %39 : vector<4x1xf32> to vector<4x3xf32>
    %41 = arith.mulf %40, %7 : vector<4x3xf32>
    %42 = arith.addf %38, %41 : vector<4x3xf32>
    %43 = vector.extract_strided_slice %42 {offsets = [0, 0], sizes = [4, 1], strides = [1, 1]} : vector<4x3xf32> to vector<4x1xf32>
    %44 = vector.extract_strided_slice %9 {offsets = [0, 0], sizes = [4, 1], strides = [1, 1]} : vector<4x3xf32> to vector<4x1xf32>
    %45 = arith.mulf %43, %44 : vector<4x1xf32>
    %46 = vector.extract_strided_slice %42 {offsets = [0, 1], sizes = [4, 1], strides = [1, 1]} : vector<4x3xf32> to vector<4x1xf32>
    %47 = vector.extract_strided_slice %9 {offsets = [0, 1], sizes = [4, 1], strides = [1, 1]} : vector<4x3xf32> to vector<4x1xf32>
    %48 = arith.mulf %46, %47 : vector<4x1xf32>
    %49 = arith.addf %45, %48 : vector<4x1xf32>
    %50 = vector.extract_strided_slice %42 {offsets = [0, 2], sizes = [4, 1], strides = [1, 1]} : vector<4x3xf32> to vector<4x1xf32>
    %51 = vector.extract_strided_slice %9 {offsets = [0, 2], sizes = [4, 1], strides = [1, 1]} : vector<4x3xf32> to vector<4x1xf32>
    %52 = arith.mulf %50, %51 : vector<4x1xf32>
    %53 = arith.addf %49, %52 : vector<4x1xf32>
    %54 = vector.extract_strided_slice %2 {offsets = [0, 1], sizes = [4, 1], strides = [1, 1]} : vector<4x8xf32> to vector<4x1xf32>
    %55 = vector.extract_strided_slice %3 {offsets = [0, 1], sizes = [4, 1], strides = [1, 1]} : vector<4x8xf32> to vector<4x1xf32>
    %56 = arith.subf %55, %53 : vector<4x1xf32>
    %57 = vector.broadcast %54 : vector<4x1xf32> to vector<4x3xf32>
    %58 = arith.mulf %57, %8 : vector<4x3xf32>
    %59 = vector.broadcast %56 : vector<4x1xf32> to vector<4x3xf32>
    %60 = arith.mulf %59, %10 : vector<4x3xf32>
    %61 = arith.addf %58, %60 : vector<4x3xf32>
    %62 = vector.extract_strided_slice %42 {offsets = [0, 0], sizes = [4, 1], strides = [1, 1]} : vector<4x3xf32> to vector<4x1xf32>
    %63 = vector.broadcast %62 : vector<4x1xf32> to vector<4x3xf32>
    %64 = arith.mulf %63, %5 : vector<4x3xf32>
    %65 = arith.addf %61, %64 : vector<4x3xf32>
    %66 = vector.extract_strided_slice %42 {offsets = [0, 1], sizes = [4, 1], strides = [1, 1]} : vector<4x3xf32> to vector<4x1xf32>
    %67 = vector.broadcast %66 : vector<4x1xf32> to vector<4x3xf32>
    %68 = arith.mulf %67, %6 : vector<4x3xf32>
    %69 = arith.addf %65, %68 : vector<4x3xf32>
    %70 = vector.extract_strided_slice %42 {offsets = [0, 2], sizes = [4, 1], strides = [1, 1]} : vector<4x3xf32> to vector<4x1xf32>
    %71 = vector.broadcast %70 : vector<4x1xf32> to vector<4x3xf32>
    %72 = arith.mulf %71, %7 : vector<4x3xf32>
    %73 = arith.addf %69, %72 : vector<4x3xf32>
    %74 = vector.extract_strided_slice %73 {offsets = [0, 0], sizes = [4, 1], strides = [1, 1]} : vector<4x3xf32> to vector<4x1xf32>
    %75 = vector.extract_strided_slice %9 {offsets = [0, 0], sizes = [4, 1], strides = [1, 1]} : vector<4x3xf32> to vector<4x1xf32>
    %76 = arith.mulf %74, %75 : vector<4x1xf32>
    %77 = vector.extract_strided_slice %73 {offsets = [0, 1], sizes = [4, 1], strides = [1, 1]} : vector<4x3xf32> to vector<4x1xf32>
    %78 = vector.extract_strided_slice %9 {offsets = [0, 1], sizes = [4, 1], strides = [1, 1]} : vector<4x3xf32> to vector<4x1xf32>
    %79 = arith.mulf %77, %78 : vector<4x1xf32>
    %80 = arith.addf %76, %79 : vector<4x1xf32>
    %81 = vector.extract_strided_slice %73 {offsets = [0, 2], sizes = [4, 1], strides = [1, 1]} : vector<4x3xf32> to vector<4x1xf32>
    %82 = vector.extract_strided_slice %9 {offsets = [0, 2], sizes = [4, 1], strides = [1, 1]} : vector<4x3xf32> to vector<4x1xf32>
    %83 = arith.mulf %81, %82 : vector<4x1xf32>
    %84 = arith.addf %80, %83 : vector<4x1xf32>
    %85 = vector.extract_strided_slice %2 {offsets = [0, 2], sizes = [4, 1], strides = [1, 1]} : vector<4x8xf32> to vector<4x1xf32>
    %86 = vector.extract_strided_slice %3 {offsets = [0, 2], sizes = [4, 1], strides = [1, 1]} : vector<4x8xf32> to vector<4x1xf32>
    %87 = arith.subf %86, %84 : vector<4x1xf32>
    %88 = vector.broadcast %85 : vector<4x1xf32> to vector<4x3xf32>
    %89 = arith.mulf %88, %8 : vector<4x3xf32>
    %90 = vector.broadcast %87 : vector<4x1xf32> to vector<4x3xf32>
    %91 = arith.mulf %90, %10 : vector<4x3xf32>
    %92 = arith.addf %89, %91 : vector<4x3xf32>
    %93 = vector.extract_strided_slice %73 {offsets = [0, 0], sizes = [4, 1], strides = [1, 1]} : vector<4x3xf32> to vector<4x1xf32>
    %94 = vector.broadcast %93 : vector<4x1xf32> to vector<4x3xf32>
    %95 = arith.mulf %94, %5 : vector<4x3xf32>
    %96 = arith.addf %92, %95 : vector<4x3xf32>
    %97 = vector.extract_strided_slice %73 {offsets = [0, 1], sizes = [4, 1], strides = [1, 1]} : vector<4x3xf32> to vector<4x1xf32>
    %98 = vector.broadcast %97 : vector<4x1xf32> to vector<4x3xf32>
    %99 = arith.mulf %98, %6 : vector<4x3xf32>
    %100 = arith.addf %96, %99 : vector<4x3xf32>
    %101 = vector.extract_strided_slice %73 {offsets = [0, 2], sizes = [4, 1], strides = [1, 1]} : vector<4x3xf32> to vector<4x1xf32>
    %102 = vector.broadcast %101 : vector<4x1xf32> to vector<4x3xf32>
    %103 = arith.mulf %102, %7 : vector<4x3xf32>
    %104 = arith.addf %100, %103 : vector<4x3xf32>
    %105 = vector.extract_strided_slice %104 {offsets = [0, 0], sizes = [4, 1], strides = [1, 1]} : vector<4x3xf32> to vector<4x1xf32>
    %106 = vector.extract_strided_slice %9 {offsets = [0, 0], sizes = [4, 1], strides = [1, 1]} : vector<4x3xf32> to vector<4x1xf32>
    %107 = arith.mulf %105, %106 : vector<4x1xf32>
    %108 = vector.extract_strided_slice %104 {offsets = [0, 1], sizes = [4, 1], strides = [1, 1]} : vector<4x3xf32> to vector<4x1xf32>
    %109 = vector.extract_strided_slice %9 {offsets = [0, 1], sizes = [4, 1], strides = [1, 1]} : vector<4x3xf32> to vector<4x1xf32>
    %110 = arith.mulf %108, %109 : vector<4x1xf32>
    %111 = arith.addf %107, %110 : vector<4x1xf32>
    %112 = vector.extract_strided_slice %104 {offsets = [0, 2], sizes = [4, 1], strides = [1, 1]} : vector<4x3xf32> to vector<4x1xf32>
    %113 = vector.extract_strided_slice %9 {offsets = [0, 2], sizes = [4, 1], strides = [1, 1]} : vector<4x3xf32> to vector<4x1xf32>
    %114 = arith.mulf %112, %113 : vector<4x1xf32>
    %115 = arith.addf %111, %114 : vector<4x1xf32>
    %116 = vector.extract_strided_slice %2 {offsets = [0, 3], sizes = [4, 1], strides = [1, 1]} : vector<4x8xf32> to vector<4x1xf32>
    %117 = vector.extract_strided_slice %3 {offsets = [0, 3], sizes = [4, 1], strides = [1, 1]} : vector<4x8xf32> to vector<4x1xf32>
    %118 = arith.subf %117, %115 : vector<4x1xf32>
    %119 = vector.broadcast %116 : vector<4x1xf32> to vector<4x3xf32>
    %120 = arith.mulf %119, %8 : vector<4x3xf32>
    %121 = vector.broadcast %118 : vector<4x1xf32> to vector<4x3xf32>
    %122 = arith.mulf %121, %10 : vector<4x3xf32>
    %123 = arith.addf %120, %122 : vector<4x3xf32>
    %124 = vector.extract_strided_slice %104 {offsets = [0, 0], sizes = [4, 1], strides = [1, 1]} : vector<4x3xf32> to vector<4x1xf32>
    %125 = vector.broadcast %124 : vector<4x1xf32> to vector<4x3xf32>
    %126 = arith.mulf %125, %5 : vector<4x3xf32>
    %127 = arith.addf %123, %126 : vector<4x3xf32>
    %128 = vector.extract_strided_slice %104 {offsets = [0, 1], sizes = [4, 1], strides = [1, 1]} : vector<4x3xf32> to vector<4x1xf32>
    %129 = vector.broadcast %128 : vector<4x1xf32> to vector<4x3xf32>
    %130 = arith.mulf %129, %6 : vector<4x3xf32>
    %131 = arith.addf %127, %130 : vector<4x3xf32>
    %132 = vector.extract_strided_slice %104 {offsets = [0, 2], sizes = [4, 1], strides = [1, 1]} : vector<4x3xf32> to vector<4x1xf32>
    %133 = vector.broadcast %132 : vector<4x1xf32> to vector<4x3xf32>
    %134 = arith.mulf %133, %7 : vector<4x3xf32>
    %135 = arith.addf %131, %134 : vector<4x3xf32>
    %136 = vector.extract_strided_slice %135 {offsets = [0, 0], sizes = [4, 1], strides = [1, 1]} : vector<4x3xf32> to vector<4x1xf32>
    %137 = vector.extract_strided_slice %9 {offsets = [0, 0], sizes = [4, 1], strides = [1, 1]} : vector<4x3xf32> to vector<4x1xf32>
    %138 = arith.mulf %136, %137 : vector<4x1xf32>
    %139 = vector.extract_strided_slice %135 {offsets = [0, 1], sizes = [4, 1], strides = [1, 1]} : vector<4x3xf32> to vector<4x1xf32>
    %140 = vector.extract_strided_slice %9 {offsets = [0, 1], sizes = [4, 1], strides = [1, 1]} : vector<4x3xf32> to vector<4x1xf32>
    %141 = arith.mulf %139, %140 : vector<4x1xf32>
    %142 = arith.addf %138, %141 : vector<4x1xf32>
    %143 = vector.extract_strided_slice %135 {offsets = [0, 2], sizes = [4, 1], strides = [1, 1]} : vector<4x3xf32> to vector<4x1xf32>
    %144 = vector.extract_strided_slice %9 {offsets = [0, 2], sizes = [4, 1], strides = [1, 1]} : vector<4x3xf32> to vector<4x1xf32>
    %145 = arith.mulf %143, %144 : vector<4x1xf32>
    %146 = arith.addf %142, %145 : vector<4x1xf32>
    %147 = vector.extract_strided_slice %2 {offsets = [0, 4], sizes = [4, 1], strides = [1, 1]} : vector<4x8xf32> to vector<4x1xf32>
    %148 = vector.extract_strided_slice %3 {offsets = [0, 4], sizes = [4, 1], strides = [1, 1]} : vector<4x8xf32> to vector<4x1xf32>
    %149 = arith.subf %148, %146 : vector<4x1xf32>
    %150 = vector.broadcast %147 : vector<4x1xf32> to vector<4x3xf32>
    %151 = arith.mulf %150, %8 : vector<4x3xf32>
    %152 = vector.broadcast %149 : vector<4x1xf32> to vector<4x3xf32>
    %153 = arith.mulf %152, %10 : vector<4x3xf32>
    %154 = arith.addf %151, %153 : vector<4x3xf32>
    %155 = vector.extract_strided_slice %135 {offsets = [0, 0], sizes = [4, 1], strides = [1, 1]} : vector<4x3xf32> to vector<4x1xf32>
    %156 = vector.broadcast %155 : vector<4x1xf32> to vector<4x3xf32>
    %157 = arith.mulf %156, %5 : vector<4x3xf32>
    %158 = arith.addf %154, %157 : vector<4x3xf32>
    %159 = vector.extract_strided_slice %135 {offsets = [0, 1], sizes = [4, 1], strides = [1, 1]} : vector<4x3xf32> to vector<4x1xf32>
    %160 = vector.broadcast %159 : vector<4x1xf32> to vector<4x3xf32>
    %161 = arith.mulf %160, %6 : vector<4x3xf32>
    %162 = arith.addf %158, %161 : vector<4x3xf32>
    %163 = vector.extract_strided_slice %135 {offsets = [0, 2], sizes = [4, 1], strides = [1, 1]} : vector<4x3xf32> to vector<4x1xf32>
    %164 = vector.broadcast %163 : vector<4x1xf32> to vector<4x3xf32>
    %165 = arith.mulf %164, %7 : vector<4x3xf32>
    %166 = arith.addf %162, %165 : vector<4x3xf32>
    %167 = vector.extract_strided_slice %166 {offsets = [0, 0], sizes = [4, 1], strides = [1, 1]} : vector<4x3xf32> to vector<4x1xf32>
    %168 = vector.extract_strided_slice %9 {offsets = [0, 0], sizes = [4, 1], strides = [1, 1]} : vector<4x3xf32> to vector<4x1xf32>
    %169 = arith.mulf %167, %168 : vector<4x1xf32>
    %170 = vector.extract_strided_slice %166 {offsets = [0, 1], sizes = [4, 1], strides = [1, 1]} : vector<4x3xf32> to vector<4x1xf32>
    %171 = vector.extract_strided_slice %9 {offsets = [0, 1], sizes = [4, 1], strides = [1, 1]} : vector<4x3xf32> to vector<4x1xf32>
    %172 = arith.mulf %170, %171 : vector<4x1xf32>
    %173 = arith.addf %169, %172 : vector<4x1xf32>
    %174 = vector.extract_strided_slice %166 {offsets = [0, 2], sizes = [4, 1], strides = [1, 1]} : vector<4x3xf32> to vector<4x1xf32>
    %175 = vector.extract_strided_slice %9 {offsets = [0, 2], sizes = [4, 1], strides = [1, 1]} : vector<4x3xf32> to vector<4x1xf32>
    %176 = arith.mulf %174, %175 : vector<4x1xf32>
    %177 = arith.addf %173, %176 : vector<4x1xf32>
    %178 = vector.extract_strided_slice %2 {offsets = [0, 5], sizes = [4, 1], strides = [1, 1]} : vector<4x8xf32> to vector<4x1xf32>
    %179 = vector.extract_strided_slice %3 {offsets = [0, 5], sizes = [4, 1], strides = [1, 1]} : vector<4x8xf32> to vector<4x1xf32>
    %180 = arith.subf %179, %177 : vector<4x1xf32>
    %181 = vector.broadcast %178 : vector<4x1xf32> to vector<4x3xf32>
    %182 = arith.mulf %181, %8 : vector<4x3xf32>
    %183 = vector.broadcast %180 : vector<4x1xf32> to vector<4x3xf32>
    %184 = arith.mulf %183, %10 : vector<4x3xf32>
    %185 = arith.addf %182, %184 : vector<4x3xf32>
    %186 = vector.extract_strided_slice %166 {offsets = [0, 0], sizes = [4, 1], strides = [1, 1]} : vector<4x3xf32> to vector<4x1xf32>
    %187 = vector.broadcast %186 : vector<4x1xf32> to vector<4x3xf32>
    %188 = arith.mulf %187, %5 : vector<4x3xf32>
    %189 = arith.addf %185, %188 : vector<4x3xf32>
    %190 = vector.extract_strided_slice %166 {offsets = [0, 1], sizes = [4, 1], strides = [1, 1]} : vector<4x3xf32> to vector<4x1xf32>
    %191 = vector.broadcast %190 : vector<4x1xf32> to vector<4x3xf32>
    %192 = arith.mulf %191, %6 : vector<4x3xf32>
    %193 = arith.addf %189, %192 : vector<4x3xf32>
    %194 = vector.extract_strided_slice %166 {offsets = [0, 2], sizes = [4, 1], strides = [1, 1]} : vector<4x3xf32> to vector<4x1xf32>
    %195 = vector.broadcast %194 : vector<4x1xf32> to vector<4x3xf32>
    %196 = arith.mulf %195, %7 : vector<4x3xf32>
    %197 = arith.addf %193, %196 : vector<4x3xf32>
    %198 = vector.extract_strided_slice %197 {offsets = [0, 0], sizes = [4, 1], strides = [1, 1]} : vector<4x3xf32> to vector<4x1xf32>
    %199 = vector.extract_strided_slice %9 {offsets = [0, 0], sizes = [4, 1], strides = [1, 1]} : vector<4x3xf32> to vector<4x1xf32>
    %200 = arith.mulf %198, %199 : vector<4x1xf32>
    %201 = vector.extract_strided_slice %197 {offsets = [0, 1], sizes = [4, 1], strides = [1, 1]} : vector<4x3xf32> to vector<4x1xf32>
    %202 = vector.extract_strided_slice %9 {offsets = [0, 1], sizes = [4, 1], strides = [1, 1]} : vector<4x3xf32> to vector<4x1xf32>
    %203 = arith.mulf %201, %202 : vector<4x1xf32>
    %204 = arith.addf %200, %203 : vector<4x1xf32>
    %205 = vector.extract_strided_slice %197 {offsets = [0, 2], sizes = [4, 1], strides = [1, 1]} : vector<4x3xf32> to vector<4x1xf32>
    %206 = vector.extract_strided_slice %9 {offsets = [0, 2], sizes = [4, 1], strides = [1, 1]} : vector<4x3xf32> to vector<4x1xf32>
    %207 = arith.mulf %205, %206 : vector<4x1xf32>
    %208 = arith.addf %204, %207 : vector<4x1xf32>
    %209 = vector.extract_strided_slice %2 {offsets = [0, 6], sizes = [4, 1], strides = [1, 1]} : vector<4x8xf32> to vector<4x1xf32>
    %210 = vector.extract_strided_slice %3 {offsets = [0, 6], sizes = [4, 1], strides = [1, 1]} : vector<4x8xf32> to vector<4x1xf32>
    %211 = arith.subf %210, %208 : vector<4x1xf32>
    %212 = vector.broadcast %209 : vector<4x1xf32> to vector<4x3xf32>
    %213 = arith.mulf %212, %8 : vector<4x3xf32>
    %214 = vector.broadcast %211 : vector<4x1xf32> to vector<4x3xf32>
    %215 = arith.mulf %214, %10 : vector<4x3xf32>
    %216 = arith.addf %213, %215 : vector<4x3xf32>
    %217 = vector.extract_strided_slice %197 {offsets = [0, 0], sizes = [4, 1], strides = [1, 1]} : vector<4x3xf32> to vector<4x1xf32>
    %218 = vector.broadcast %217 : vector<4x1xf32> to vector<4x3xf32>
    %219 = arith.mulf %218, %5 : vector<4x3xf32>
    %220 = arith.addf %216, %219 : vector<4x3xf32>
    %221 = vector.extract_strided_slice %197 {offsets = [0, 1], sizes = [4, 1], strides = [1, 1]} : vector<4x3xf32> to vector<4x1xf32>
    %222 = vector.broadcast %221 : vector<4x1xf32> to vector<4x3xf32>
    %223 = arith.mulf %222, %6 : vector<4x3xf32>
    %224 = arith.addf %220, %223 : vector<4x3xf32>
    %225 = vector.extract_strided_slice %197 {offsets = [0, 2], sizes = [4, 1], strides = [1, 1]} : vector<4x3xf32> to vector<4x1xf32>
    %226 = vector.broadcast %225 : vector<4x1xf32> to vector<4x3xf32>
    %227 = arith.mulf %226, %7 : vector<4x3xf32>
    %228 = arith.addf %224, %227 : vector<4x3xf32>
    %229 = vector.extract_strided_slice %228 {offsets = [0, 0], sizes = [4, 1], strides = [1, 1]} : vector<4x3xf32> to vector<4x1xf32>
    %230 = vector.extract_strided_slice %9 {offsets = [0, 0], sizes = [4, 1], strides = [1, 1]} : vector<4x3xf32> to vector<4x1xf32>
    %231 = arith.mulf %229, %230 : vector<4x1xf32>
    %232 = vector.extract_strided_slice %228 {offsets = [0, 1], sizes = [4, 1], strides = [1, 1]} : vector<4x3xf32> to vector<4x1xf32>
    %233 = vector.extract_strided_slice %9 {offsets = [0, 1], sizes = [4, 1], strides = [1, 1]} : vector<4x3xf32> to vector<4x1xf32>
    %234 = arith.mulf %232, %233 : vector<4x1xf32>
    %235 = arith.addf %231, %234 : vector<4x1xf32>
    %236 = vector.extract_strided_slice %228 {offsets = [0, 2], sizes = [4, 1], strides = [1, 1]} : vector<4x3xf32> to vector<4x1xf32>
    %237 = vector.extract_strided_slice %9 {offsets = [0, 2], sizes = [4, 1], strides = [1, 1]} : vector<4x3xf32> to vector<4x1xf32>
    %238 = arith.mulf %236, %237 : vector<4x1xf32>
    %239 = arith.addf %235, %238 : vector<4x1xf32>
    %240 = tpu.concatenate %22, %53, %84, %115, %146, %177, %208, %239 in 1 : vector<4x1xf32>, vector<4x1xf32>, vector<4x1xf32>, vector<4x1xf32>, vector<4x1xf32>, vector<4x1xf32>, vector<4x1xf32>, vector<4x1xf32> -> vector<4x8xf32>
    %241 = vector.extract_strided_slice %240 {offsets = [0, 0], sizes = [2, 8], strides = [1, 1]} : vector<4x8xf32> to vector<2x8xf32>
    %242 = vector.extract_strided_slice %240 {offsets = [2, 0], sizes = [2, 8], strides = [1, 1]} : vector<4x8xf32> to vector<2x8xf32>
    %243 = tpu.concatenate %241, %242 in 1 : vector<2x8xf32>, vector<2x8xf32> -> vector<2x16xf32>
    %244 = math.tanh %243 : vector<2x16xf32>
    %c0_5 = arith.constant 0 : index
    %c0_6 = arith.constant 0 : index
    %245 = vector.load %arg4[%c0_5, %c0_6] : memref<16x8xf32, #tpu.memory_space<vmem>>, vector<16x8xf32>
    %cst_7 = arith.constant dense<0.000000e+00> : vector<2x8xf32>
    %246 = tpu.matmul %244, %245, %cst_7 {dimension_numbers = #tpu.dot_dimension_numbers<[1], [0], [0], [1], [0, 0, 1, 1], [], []>} : vector<2x16xf32>, vector<16x8xf32>, vector<2x8xf32> -> vector<2x8xf32>
    %247 = math.tanh %246 : vector<2x8xf32>
    %c0_8 = arith.constant 0 : index
    %c0_9 = arith.constant 0 : index
    %248 = vector.load %arg5[%c0_8, %c0_9] : memref<2x8xf32, #tpu.memory_space<vmem>>, vector<2x8xf32>
    tpu.vector_store %arg5[%c0_8, %c0_9], %247 {strides = array<i32>} : memref<2x8xf32, #tpu.memory_space<vmem>>, vector<2x8xf32>,
    return
  }
  func.func @transform_0(%arg0: i32) -> (i32, i32) {
    %c0_i32 = arith.constant 0 : i32
    %c0_i32_0 = arith.constant 0 : i32
    %c0_i32_1 = arith.constant 0 : i32
    return %c0_i32, %c0_i32_0 : i32, i32
  }
  func.func @transform_1(%arg0: i32) -> (i32, i32) {
    %c0_i32 = arith.constant 0 : i32
    %c0_i32_0 = arith.constant 0 : i32
    %c0_i32_1 = arith.constant 0 : i32
    return %c0_i32, %c0_i32_0 : i32, i32
  }
  func.func @transform_2(%arg0: i32) -> (i32, i32) {
    %c0_i32 = arith.constant 0 : i32
    %c0_i32_0 = arith.constant 0 : i32
    %c0_i32_1 = arith.constant 0 : i32
    return %c0_i32, %c0_i32_0 : i32, i32
  }
  func.func @transform_3(%arg0: i32) -> (i32, i32) {
    %c0_i32 = arith.constant 0 : i32
    %c0_i32_0 = arith.constant 0 : i32
    %c0_i32_1 = arith.constant 0 : i32
    return %c0_i32, %c0_i32_0 : i32, i32
  }
  func.func @transform_4(%arg0: i32) -> (i32, i32) {
    %c0_i32 = arith.constant 0 : i32
    %c0_i32_0 = arith.constant 0 : i32
    %c0_i32_1 = arith.constant 0 : i32
    return %c0_i32, %c0_i32_0 : i32, i32
  }
}

</mosaic_0001>

<llo_original>
// kernel: parallel_model_forward.1
$region0: #{parallel_model_forward.1}
  #allocation0 [shape = 'u32[]', space=smem, size = 0x4, offset = 0x4, fixed_abs, tag = 'smem constant byte address 0x4 - core index']
  #allocation1 [shape = 'u32[144,128]{1,0:T(1,128)}', space=vmem, size = 0x12000, scoped, tag = 'internal scratch']
  %s0 = inlined_call_operand.vmem [shape: f32[2,8], index: 0, kind: input, shape index: {}]
  %s1 = inlined_call_operand.vmem [shape: f32[2,8], index: 1, kind: input, shape index: {}]
  %s2 = inlined_call_operand.vmem [shape: f32[4,18], index: 2, kind: input, shape index: {}]
  %s3 = inlined_call_operand.vmem [shape: f32[16,8], index: 3, kind: input, shape index: {}]
  %s4 = inlined_call_operand.hbm [shape: f32[2,8], index: 4, kind: output, shape index: {}]
  %s5 = sld [smem:[#allocation0]]
  $region26: #{parallel_model_forward.1} parent=0
    _
  %s7 = ssub.s32 1, %s5
  %s8 = scalar_select 0, %s7, %s5
  $region1: #{parallel_model_forward.1} parent=0
    #allocation2 [shape = 'u8[1024]{0}', space=vmem, size = 0x400, scoped, tag = 'output window, operand 0, single buffered']
    #allocation3 [shape = 's32[1]{0}', space=sflag, size = 0x4, scoped, tag = 'scoped memory for parallel_model_forward.1']
    %9 = vsyncpa [#allocation3], 0
    // Predicated region
    $region2: #{parallel_model_forward.1} parent=1 // pred_check
      _
    $region3: #{parallel_model_forward.1} parent=1 // pred_check_branch
      %11 = sbr.rel (0) target = $region5
    $region4: #{parallel_model_forward.1} parent=1 // pred_region
      _
    $region5: #{parallel_model_forward.1} parent=1 // pred_fallthru
      _
    // Predicated region
    $region6: #{parallel_model_forward.1} parent=1 // pred_check
      _
    $region7: #{parallel_model_forward.1} parent=1 // pred_check_branch
      %13 = sbr.rel (0) target = $region9
    $region8: #{parallel_model_forward.1} parent=1 // pred_region
      _
    $region9: #{parallel_model_forward.1} parent=1 // pred_fallthru
      _
    // Predicated region
    $region10: #{parallel_model_forward.1} parent=1 // pred_check
      _
    $region11: #{parallel_model_forward.1} parent=1 // pred_check_branch
      %15 = sbr.rel (0) target = $region13
    $region12: #{parallel_model_forward.1} parent=1 // pred_region
      _
    $region13: #{parallel_model_forward.1} parent=1 // pred_fallthru
      _
    // Predicated region
    $region14: #{parallel_model_forward.1} parent=1 // pred_check
      _
    $region15: #{parallel_model_forward.1} parent=1 // pred_check_branch
      %17 = sbr.rel (0) target = $region17
    $region16: #{parallel_model_forward.1} parent=1 // pred_region
      _
    $region17: #{parallel_model_forward.1} parent=1 // pred_fallthru
      _
    %v18 = vld [vmem:[%s0] sm:$0x3]
    %v19 = vld [vmem:[%s1] sm:$0x3]
    %v21 = vrot.slane %v18, 6
    %vm23 = vcmask 1041408
    %v24 = vsel %vm23, %v18, %v21
    %v26 = vrot.slane %v19, 6
    %v28 = vsel %vm23, %v19, %v26
    %v29 = vld [vmem:[%s2] sm:$0xf]
    %v30 = vmul.f32 %v29, 0.0
    %32 = vrot.lane.b32.xlu0 %v30, 127
    %v33 = vpop.permute.xlu0 %32
    %v35 = vadd.f32 %v30, %v33
    %36 = vrot.lane.b32.xlu0 %v30, 126
    %v37 = vpop.permute.xlu0 %36
    %v39 = vadd.f32 %v35, %v37
    %41 = vrot.lane.b32.xlu0 %v39, 116
    %v42 = vpop.permute.xlu0 %41
    %v44 = vsub.f32 %v28, %v42
    %46 = vset.pattern.permute.xlu0 0
    %47 = vperm.xlu0 %46, %v24
    %v48 = vpop.permute.xlu0 %47
    %v50 = vmul.f32 %v48, %v29
    %52 = vset.pattern.permute.xlu0 0
    %53 = vperm.xlu0 %52, %v44
    %v54 = vpop.permute.xlu0 %53
    %v56 = vmul.f32 %v54, %v29
    %58 = vrot.lane.b32.xlu0 %v56, 122
    %v59 = vpop.permute.xlu0 %58
    %v61 = vadd.f32 %v50, %v59
    %62 = vrot.lane.b32.xlu0 %v30, 9
    %v63 = vpop.permute.xlu0 %62
    %v65 = vadd.f32 %v61, %v63
    %66 = vrot.lane.b32.xlu0 %v30, 6
    %v67 = vpop.permute.xlu0 %66
    %v69 = vadd.f32 %v65, %v67
    %70 = vrot.lane.b32.xlu0 %v30, 3
    %v71 = vpop.permute.xlu0 %70
    %v73 = vadd.f32 %v69, %v71
    %75 = vrot.lane.b32.xlu0 %v29, 125
    %v76 = vpop.permute.xlu0 %75
    %v78 = vmul.f32 %v73, %v76
    %80 = vrot.lane.b32.xlu0 %v78, 127
    %v81 = vpop.permute.xlu0 %80
    %v83 = vadd.f32 %v78, %v81
    %84 = vrot.lane.b32.xlu0 %v78, 126
    %v85 = vpop.permute.xlu0 %84
    %v87 = vadd.f32 %v83, %v85
    %89 = vrot.lane.b32.xlu0 %v87, 120
    %v90 = vpop.permute.xlu0 %89
    %v92 = vsub.f32 %v28, %v90
    %93 = vset.pattern.permute.xlu0 1
    %94 = vperm.xlu0 %93, %v24
    %v95 = vpop.permute.xlu0 %94
    %v97 = vmul.f32 %v95, %v29
    %99 = vset.pattern.permute.xlu0 1
    %100 = vperm.xlu0 %99, %v92
    %v101 = vpop.permute.xlu0 %100
    %v103 = vmul.f32 %v101, %v29
    %105 = vrot.lane.b32.xlu0 %v103, 122
    %v106 = vpop.permute.xlu0 %105
    %v108 = vadd.f32 %v97, %v106
    %110 = vset.pattern.permute.xlu0 9
    %111 = vperm.xlu0 %110, %v73
    %v112 = vpop.permute.xlu0 %111
    %v114 = vmul.f32 %v112, %v29
    %116 = vrot.lane.b32.xlu0 %v114, 9
    %v117 = vpop.permute.xlu0 %116
    %v119 = vadd.f32 %v108, %v117
    %120 = vset.pattern.permute.xlu0 10
    %121 = vperm.xlu0 %120, %v73
    %v122 = vpop.permute.xlu0 %121
    %v124 = vmul.f32 %v122, %v29
    %126 = vrot.lane.b32.xlu0 %v124, 6
    %v127 = vpop.permute.xlu0 %126
    %v129 = vadd.f32 %v119, %v127
    %130 = vset.pattern.permute.xlu0 11
    %131 = vperm.xlu0 %130, %v73
    %v132 = vpop.permute.xlu0 %131
    %v134 = vmul.f32 %v132, %v29
    %136 = vrot.lane.b32.xlu0 %v134, 3
    %v137 = vpop.permute.xlu0 %136
    %v139 = vadd.f32 %v129, %v137
    %v140 = vmul.f32 %v139, %v76
    %142 = vrot.lane.b32.xlu0 %v140, 127
    %v143 = vpop.permute.xlu0 %142
    %v145 = vadd.f32 %v140, %v143
    %146 = vrot.lane.b32.xlu0 %v140, 126
    %v147 = vpop.permute.xlu0 %146
    %v149 = vadd.f32 %v145, %v147
    %151 = vrot.lane.b32.xlu0 %v149, 121
    %v152 = vpop.permute.xlu0 %151
    %v154 = vsub.f32 %v28, %v152
    %155 = vset.pattern.permute.xlu0 2
    %156 = vperm.xlu0 %155, %v24
    %v157 = vpop.permute.xlu0 %156
    %v159 = vmul.f32 %v157, %v29
    %161 = vset.pattern.permute.xlu0 2
    %162 = vperm.xlu0 %161, %v154
    %v163 = vpop.permute.xlu0 %162
    %v165 = vmul.f32 %v163, %v29
    %167 = vrot.lane.b32.xlu0 %v165, 122
    %v168 = vpop.permute.xlu0 %167
    %v170 = vadd.f32 %v159, %v168
    %172 = vset.pattern.permute.xlu0 9
    %173 = vperm.xlu0 %172, %v139
    %v174 = vpop.permute.xlu0 %173
    %v176 = vmul.f32 %v174, %v29
    %178 = vrot.lane.b32.xlu0 %v176, 9
    %v179 = vpop.permute.xlu0 %178
    %v181 = vadd.f32 %v170, %v179
    %182 = vset.pattern.permute.xlu0 10
    %183 = vperm.xlu0 %182, %v139
    %v184 = vpop.permute.xlu0 %183
    %v186 = vmul.f32 %v184, %v29
    %188 = vrot.lane.b32.xlu0 %v186, 6
    %v189 = vpop.permute.xlu0 %188
    %v191 = vadd.f32 %v181, %v189
    %192 = vset.pattern.permute.xlu0 11
    %193 = vperm.xlu0 %192, %v139
    %v194 = vpop.permute.xlu0 %193
    %v196 = vmul.f32 %v194, %v29
    %198 = vrot.lane.b32.xlu0 %v196, 3
    %v199 = vpop.permute.xlu0 %198
    %v201 = vadd.f32 %v191, %v199
    %v202 = vmul.f32 %v201, %v76
    %204 = vrot.lane.b32.xlu0 %v202, 127
    %v205 = vpop.permute.xlu0 %204
    %v207 = vadd.f32 %v202, %v205
    %208 = vrot.lane.b32.xlu0 %v202, 126
    %v209 = vpop.permute.xlu0 %208
    %v211 = vadd.f32 %v207, %v209
    %213 = vrot.lane.b32.xlu0 %v211, 122
    %v214 = vpop.permute.xlu0 %213
    %v216 = vsub.f32 %v28, %v214
    %217 = vset.pattern.permute.xlu0 3
    %218 = vperm.xlu0 %217, %v24
    %v219 = vpop.permute.xlu0 %218
    %v221 = vmul.f32 %v219, %v29
    %223 = vset.pattern.permute.xlu0 3
    %224 = vperm.xlu0 %223, %v216
    %v225 = vpop.permute.xlu0 %224
    %v227 = vmul.f32 %v225, %v29
    %229 = vrot.lane.b32.xlu0 %v227, 122
    %v230 = vpop.permute.xlu0 %229
    %v232 = vadd.f32 %v221, %v230
    %234 = vset.pattern.permute.xlu0 9
    %235 = vperm.xlu0 %234, %v201
    %v236 = vpop.permute.xlu0 %235
    %v238 = vmul.f32 %v236, %v29
    %240 = vrot.lane.b32.xlu0 %v238, 9
    %v241 = vpop.permute.xlu0 %240
    %v243 = vadd.f32 %v232, %v241
    %244 = vset.pattern.permute.xlu0 10
    %245 = vperm.xlu0 %244, %v201
    %v246 = vpop.permute.xlu0 %245
    %v248 = vmul.f32 %v246, %v29
    %250 = vrot.lane.b32.xlu0 %v248, 6
    %v251 = vpop.permute.xlu0 %250
    %v253 = vadd.f32 %v243, %v251
    %254 = vset.pattern.permute.xlu0 11
    %255 = vperm.xlu0 %254, %v201
    %v256 = vpop.permute.xlu0 %255
    %v258 = vmul.f32 %v256, %v29
    %260 = vrot.lane.b32.xlu0 %v258, 3
    %v261 = vpop.permute.xlu0 %260
    %v263 = vadd.f32 %v253, %v261
    %v264 = vmul.f32 %v263, %v76
    %266 = vrot.lane.b32.xlu0 %v264, 127
    %v267 = vpop.permute.xlu0 %266
    %v269 = vadd.f32 %v264, %v267
    %270 = vrot.lane.b32.xlu0 %v264, 126
    %v271 = vpop.permute.xlu0 %270
    %v273 = vadd.f32 %v269, %v271
    %275 = vrot.lane.b32.xlu0 %v273, 123
    %v276 = vpop.permute.xlu0 %275
    %v278 = vsub.f32 %v28, %v276
    %279 = vset.pattern.permute.xlu0 4
    %280 = vperm.xlu0 %279, %v24
    %v281 = vpop.permute.xlu0 %280
    %v283 = vmul.f32 %v281, %v29
    %285 = vset.pattern.permute.xlu0 4
    %286 = vperm.xlu0 %285, %v278
    %v287 = vpop.permute.xlu0 %286
    %v289 = vmul.f32 %v287, %v29
    %291 = vrot.lane.b32.xlu0 %v289, 122
    %v292 = vpop.permute.xlu0 %291
    %v294 = vadd.f32 %v283, %v292
    %296 = vset.pattern.permute.xlu0 9
    %297 = vperm.xlu0 %296, %v263
    %v298 = vpop.permute.xlu0 %297
    %v300 = vmul.f32 %v298, %v29
    %302 = vrot.lane.b32.xlu0 %v300, 9
    %v303 = vpop.permute.xlu0 %302
    %v305 = vadd.f32 %v294, %v303
    %306 = vset.pattern.permute.xlu0 10
    %307 = vperm.xlu0 %306, %v263
    %v308 = vpop.permute.xlu0 %307
    %v310 = vmul.f32 %v308, %v29
    %312 = vrot.lane.b32.xlu0 %v310, 6
    %v313 = vpop.permute.xlu0 %312
    %v315 = vadd.f32 %v305, %v313
    %316 = vset.pattern.permute.xlu0 11
    %317 = vperm.xlu0 %316, %v263
    %v318 = vpop.permute.xlu0 %317
    %v320 = vmul.f32 %v318, %v29
    %322 = vrot.lane.b32.xlu0 %v320, 3
    %v323 = vpop.permute.xlu0 %322
    %v325 = vadd.f32 %v315, %v323
    %v326 = vmul.f32 %v325, %v76
    %328 = vrot.lane.b32.xlu0 %v326, 127
    %v329 = vpop.permute.xlu0 %328
    %v331 = vadd.f32 %v326, %v329
    %332 = vrot.lane.b32.xlu0 %v326, 126
    %v333 = vpop.permute.xlu0 %332
    %v335 = vadd.f32 %v331, %v333
    %337 = vrot.lane.b32.xlu0 %v335, 124
    %v338 = vpop.permute.xlu0 %337
    %v340 = vsub.f32 %v28, %v338
    %341 = vset.pattern.permute.xlu0 5
    %342 = vperm.xlu0 %341, %v24
    %v343 = vpop.permute.xlu0 %342
    %v345 = vmul.f32 %v343, %v29
    %347 = vset.pattern.permute.xlu0 5
    %348 = vperm.xlu0 %347, %v340
    %v349 = vpop.permute.xlu0 %348
    %v351 = vmul.f32 %v349, %v29
    %353 = vrot.lane.b32.xlu0 %v351, 122
    %v354 = vpop.permute.xlu0 %353
    %v356 = vadd.f32 %v345, %v354
    %358 = vset.pattern.permute.xlu0 9
    %359 = vperm.xlu0 %358, %v325
    %v360 = vpop.permute.xlu0 %359
    %v362 = vmul.f32 %v360, %v29
    %364 = vrot.lane.b32.xlu0 %v362, 9
    %v365 = vpop.permute.xlu0 %364
    %v367 = vadd.f32 %v356, %v365
    %368 = vset.pattern.permute.xlu0 10
    %369 = vperm.xlu0 %368, %v325
    %v370 = vpop.permute.xlu0 %369
    %v372 = vmul.f32 %v370, %v29
    %374 = vrot.lane.b32.xlu0 %v372, 6
    %v375 = vpop.permute.xlu0 %374
    %v377 = vadd.f32 %v367, %v375
    %378 = vset.pattern.permute.xlu0 11
    %379 = vperm.xlu0 %378, %v325
    %v380 = vpop.permute.xlu0 %379
    %v382 = vmul.f32 %v380, %v29
    %384 = vrot.lane.b32.xlu0 %v382, 3
    %v385 = vpop.permute.xlu0 %384
    %v387 = vadd.f32 %v377, %v385
    %v388 = vmul.f32 %v387, %v76
    %390 = vrot.lane.b32.xlu0 %v388, 127
    %v391 = vpop.permute.xlu0 %390
    %v393 = vadd.f32 %v388, %v391
    %394 = vrot.lane.b32.xlu0 %v388, 126
    %v395 = vpop.permute.xlu0 %394
    %v397 = vadd.f32 %v393, %v395
    %399 = vrot.lane.b32.xlu0 %v397, 125
    %v400 = vpop.permute.xlu0 %399
    %v402 = vsub.f32 %v28, %v400
    %403 = vset.pattern.permute.xlu0 6
    %404 = vperm.xlu0 %403, %v24
    %v405 = vpop.permute.xlu0 %404
    %v407 = vmul.f32 %v405, %v29
    %409 = vset.pattern.permute.xlu0 6
    %410 = vperm.xlu0 %409, %v402
    %v411 = vpop.permute.xlu0 %410
    %v413 = vmul.f32 %v411, %v29
    %415 = vrot.lane.b32.xlu0 %v413, 122
    %v416 = vpop.permute.xlu0 %415
    %v418 = vadd.f32 %v407, %v416
    %420 = vset.pattern.permute.xlu0 9
    %421 = vperm.xlu0 %420, %v387
    %v422 = vpop.permute.xlu0 %421
    %v424 = vmul.f32 %v422, %v29
    %426 = vrot.lane.b32.xlu0 %v424, 9
    %v427 = vpop.permute.xlu0 %426
    %v429 = vadd.f32 %v418, %v427
    %430 = vset.pattern.permute.xlu0 10
    %431 = vperm.xlu0 %430, %v387
    %v432 = vpop.permute.xlu0 %431
    %v434 = vmul.f32 %v432, %v29
    %436 = vrot.lane.b32.xlu0 %v434, 6
    %v437 = vpop.permute.xlu0 %436
    %v439 = vadd.f32 %v429, %v437
    %440 = vset.pattern.permute.xlu0 11
    %441 = vperm.xlu0 %440, %v387
    %v442 = vpop.permute.xlu0 %441
    %v444 = vmul.f32 %v442, %v29
    %446 = vrot.lane.b32.xlu0 %v444, 3
    %v447 = vpop.permute.xlu0 %446
    %v449 = vadd.f32 %v439, %v447
    %v450 = vmul.f32 %v449, %v76
    %452 = vrot.lane.b32.xlu0 %v450, 127
    %v453 = vpop.permute.xlu0 %452
    %v455 = vadd.f32 %v450, %v453
    %456 = vrot.lane.b32.xlu0 %v450, 126
    %v457 = vpop.permute.xlu0 %456
    %v459 = vadd.f32 %v455, %v457
    %461 = vrot.lane.b32.xlu0 %v459, 126
    %v462 = vpop.permute.xlu0 %461
    %vm464 = vcmask 7168
    %v465 = vsel %vm464, %v42, %v90
    %vm466 = vcmask 15360
    %v467 = vsel %vm466, %v465, %v152
    %vm468 = vcmask 23552
    %v469 = vsel %vm468, %v467, %v214
    %vm470 = vcmask 31744
    %v471 = vsel %vm470, %v469, %v276
    %vm472 = vcmask 39936
    %v473 = vsel %vm472, %v471, %v338
    %vm474 = vcmask 48128
    %v475 = vsel %vm474, %v473, %v400
    %vm476 = vcmask 56320
    %v477 = vsel %vm476, %v475, %v462
    %v479 = vrot.slane %v477, 2
    %480 = vrot.lane.b32.xlu0 %v479, 8
    %v481 = vpop.permute.xlu0 %480
    %vm483 = vcmask 64512
    %v484 = vsel %vm483, %v477, %v481
    %v485 = vtanh.pop %v484
    %v486 = vld [vmem:[%s3] sm:$0xff]
    %v487 = vld [vmem:[%s3 + $0x8] sm:$0xff]
    %vm488 = vcmask 130048
    %v490 = vsel %vm488, %v485, 0
    %492 = vmatprep.subr.mxu0 0.0
    %493 = vmatpush1.msra.mxu0 %v486
    %494 = vmatprep.subr.mxu0 0.0
    %495 = vmatpush1.msra.mxu0 %v487
    %496 = vmatprep.subr.mxu0 0.0
    %497 = vmatpush1.msra.mxu0 0.0
    %498 = vmatprep.subr.mxu0 0.0
    %499 = vmatpush1.msra.mxu0 0.0
    %500 = vmatprep.subr.mxu0 0.0
    %501 = vmatpush1.msra.mxu0 0.0
    %502 = vmatprep.subr.mxu0 0.0
    %503 = vmatpush1.msra.mxu0 0.0
    %504 = vmatprep.subr.mxu0 0.0
    %505 = vmatpush1.msra.mxu0 0.0
    %506 = vmatprep.subr.mxu0 0.0
    %507 = vmatpush1.msra.mxu0 0.0
    %508 = vmatprep.subr.mxu0 0.0
    %509 = vmatpush1.msra.mxu0 0.0
    %510 = vmatprep.subr.mxu0 0.0
    %511 = vmatpush1.msra.mxu0 0.0
    %512 = vmatprep.subr.mxu0 0.0
    %513 = vmatpush1.msra.mxu0 0.0
    %514 = vmatprep.subr.mxu0 0.0
    %515 = vmatpush1.msra.mxu0 0.0
    %516 = vmatprep.subr.mxu0 0.0
    %517 = vmatpush1.msra.mxu0 0.0
    %518 = vmatprep.subr.mxu0 0.0
    %519 = vmatpush1.msra.mxu0 0.0
    %520 = vmatprep.subr.mxu0 0.0
    %521 = vmatpush1.msra.mxu0 0.0
    %522 = vmatprep.subr.mxu0 0.0
    %523 = vmatpush1.msra.mxu0 0.0
    %524 = vmatprep.subr.mxu0 0.0
    %525 = vmatpush1.msra.mxu0 0.0
    %526 = vmatprep.subr.mxu0 0.0
    %527 = vmatpush1.msra.mxu0 0.0
    %528 = vmatprep.subr.mxu0 0.0
    %529 = vmatpush1.msra.mxu0 0.0
    %530 = vmatprep.subr.mxu0 0.0
    %531 = vmatpush1.msra.mxu0 0.0
    %532 = vmatprep.subr.mxu0 0.0
    %533 = vmatpush1.msra.mxu0 0.0
    %534 = vmatprep.subr.mxu0 0.0
    %535 = vmatpush1.msra.mxu0 0.0
    %536 = vmatprep.subr.mxu0 0.0
    %537 = vmatpush1.msra.mxu0 0.0
    %538 = vmatprep.subr.mxu0 0.0
    %539 = vmatpush1.msra.mxu0 0.0
    %540 = vmatprep.subr.mxu0 0.0
    %541 = vmatpush1.msra.mxu0 0.0
    %542 = vmatprep.subr.mxu0 0.0
    %543 = vmatpush1.msra.mxu0 0.0
    %544 = vmatprep.subr.mxu0 0.0
    %545 = vmatpush1.msra.mxu0 0.0
    %546 = vmatprep.subr.mxu0 0.0
    %547 = vmatpush1.msra.mxu0 0.0
    %548 = vmatprep.subr.mxu0 0.0
    %549 = vmatpush1.msra.mxu0 0.0
    %550 = vmatprep.subr.mxu0 0.0
    %551 = vmatpush1.msra.mxu0 0.0
    %552 = vmatprep.subr.mxu0 0.0
    %553 = vmatpush1.msra.mxu0 0.0
    %554 = vmatprep.subr.mxu0 0.0
    %555 = vmatpush1.msra.mxu0 0.0
    %556 = vmatprep.mubr.f32.mxu0 0.0
    %557 = vmatmul.mubr.f32.gmra.mrb[0].mxu0 %v490
    %v558 = vpop.f32.mrb[0].mxu0
    %v559 = vadd.f32 0.0, %v558
    %v560 = vpop.f32.mrb[0].mxu0
    %561 = vdwg.mxu0
    %v562 = vtanh.pop %v559
    %vm563 = vcmask 58368
    %564 = vst.msk [vmem:[#allocation2] sm:$0x3] %vm563, %v562
    // Predicated region
    $region18: #{parallel_model_forward.1} parent=1 // pred_check
      _
    $region19: #{parallel_model_forward.1} parent=1 // pred_check_branch
      %566 = sbr.rel (0) target = $region21
    $region20: #{parallel_model_forward.1} parent=1 // pred_region
      %s568 = ssub.s32 32, 32
      %569 = vsyncadd [#allocation3], %s568
      %s571 = sshll.u32 [#allocation2], 4
      %s572 = int_to_ptr.vmem [resolvable:$true] %s571
      %574 = dma.vmem_to_hbm [thread:$0]  %s572, 32, %s4, [#allocation3]
    $region21: #{parallel_model_forward.1} parent=1 // pred_fallthru
      _
    // Predicated region
    $region22: #{parallel_model_forward.1} parent=1 // pred_check
      _
    $region23: #{parallel_model_forward.1} parent=1 // pred_check_branch
      %576 = sbr.rel (0) target = $region25
    $region24: #{parallel_model_forward.1} parent=1 // pred_region
      %577 = dma.done [#allocation3], 32
    $region25: #{parallel_model_forward.1} parent=1 // pred_fallthru
      _
    %578 = vsyncpa [#allocation3], 1

</llo_original>
